<compile_context>
chip_gen: v5e
topology: v5e:2x2
jax: 0.10.0
libtpu: 0.0.40
codegen_flags: <defaults>
</compile_context>

<pallas_src>
import math
import jax
import jax.numpy as jnp
from jax.experimental import pallas as pl
from jax.experimental.pallas import tpu as pltpu

_LANES = 128
_SUBLANES = 8


def _round_up(x, m):
    return ((x + m - 1) // m) * m


def _make_loss_kernel(ignore_index: int, num_classes: int, n_rows: int,
                      block_rows: int):
    inv_c = 1.0 / float(num_classes)

    def kernel(x_ref, tgt_ref, eps_ref, part_ref):
        x = x_ref[...].astype(jnp.float32)          # (bn, C) logits (cast in-kernel)
        tgt = tgt_ref[...]                          # (bn, 1) int32
        eps_c = eps_ref[...].astype(jnp.float32)    # (1, C)  per-class smoothing

        # Boolean target mask along the class (lane) axis — never materialize
        # an f32 one-hot; use selects feeding the lane reductions instead.
        col = jax.lax.broadcasted_iota(jnp.int32, x.shape, 1)
        is_tgt = (col == tgt)                       # (bn, C) bool

        # log-softmax pieces without materializing logp:
        #   tgt_logp  = sum(x where target) - lse
        #   mean_logp = mean(x)             - lse
        m = jnp.max(x, axis=-1, keepdims=True)                      # (bn, 1)
        sum_exp = jnp.sum(jnp.exp(x - m), axis=-1, keepdims=True)   # (bn, 1)
        lse = m + jnp.log(sum_exp)                                  # (bn, 1)
        sum_x = jnp.sum(x, axis=-1, keepdims=True)                  # (bn, 1)
        tgt_x = jnp.sum(jnp.where(is_tgt, x, 0.0),
                        axis=-1, keepdims=True)                     # (bn, 1)
        eps_t = jnp.sum(jnp.where(is_tgt, eps_c, 0.0),
                        axis=-1, keepdims=True)                     # (bn, 1)

        tgt_logp = tgt_x - lse
        mean_logp = sum_x * inv_c - lse

        # validity: not ignore_index AND inside the real N rows (tail mask)
        row0 = pl.program_id(0) * block_rows
        row_ids = row0 + jax.lax.broadcasted_iota(jnp.int32, tgt.shape, 0)
        valid = jnp.logical_and(tgt != ignore_index, row_ids < n_rows)

        ce = -tgt_logp
        cali = (1.0 - eps_t) * (-tgt_logp) + eps_t * (-mean_logp)

        # jnp.where (not multiply) so garbage in padded tail rows can't leak NaN
        ce = jnp.where(valid, ce, 0.0)
        cali = jnp.where(valid, cali, 0.0)

        ce_sum = jnp.sum(ce)
        cali_sum = jnp.sum(cali)
        valid_sum = jnp.sum(valid.astype(jnp.float32))

        # lane-dense packed per-tile partials: sublane 0 -> ce, 1 -> cali, 2 -> valid
        sub = jax.lax.broadcasted_iota(jnp.int32, (1, _SUBLANES, _LANES), 1)
        packed = jnp.where(sub == 0, ce_sum,
                 jnp.where(sub == 1, cali_sum,
                 jnp.where(sub == 2, valid_sum, 0.0)))
        part_ref[...] = packed

    return kernel


def _vmem_limit_bytes():
    """Generation-aware VMEM limit: ~48 MiB on v7x (64 MiB), ~96 MiB on v5e/v6e."""
    cap = 64 << 20                                   # conservative fallback: v7x physical
    try:
        info = pltpu.get_tpu_info()
        cap_attr = getattr(info, "vmem_capacity_bytes", None)
        if cap_attr:
            cap = int(cap_attr)
    except Exception:
        pass
    limit = min(int(cap * 0.75), cap - (8 << 20))    # leave compiler/output headroom
    return max(limit, 16 << 20)


def _pick_block_rows(n_rows, num_classes, in_itemsize, vmem_limit_bytes):
    """Largest row tile whose FULL per-tile VMEM footprint fits the budget."""
    padded_n = _round_up(n_rows, _SUBLANES)

    # Per-row VMEM footprint:
    #   double-buffered native-dtype logits        : 2 * C * in_itemsize
    #   in-kernel f32 working set (x cast + exp /
    #   select temporaries, ~3 full copies)        : 3 * C * 4
    #   double-buffered lane-padded int32 targets  : 2 * 128 * 4
    per_row = num_classes * (2 * in_itemsize + 3 * 4) + 2 * _LANES * 4
    budget = max(vmem_limit_bytes - (4 << 20), vmem_limit_bytes // 2)
    rows_budget = max(_SUBLANES, budget // per_row)

    # Scale the row cap with C: aim for a >= ~2 MiB logits slab per tile so
    # small-C workloads are not dominated by per-grid-step overhead (~0.35 us).
    max_rows = max(1024, (2 << 20) // max(1, num_classes * in_itemsize))

    # Keep >= 2 grid tiles when there is more than one sublane-group of rows so
    # the "parallel" grid axis can shard across v7x's 2 TensorCores.
    if padded_n > _SUBLANES:
        multi_tc_cap = _round_up((padded_n + 1) // 2, _SUBLANES)
    else:
        multi_tc_cap = padded_n

    rows = min(rows_budget, max_rows, multi_tc_cap, padded_n)
    rows = max(_SUBLANES, (rows // _SUBLANES) * _SUBLANES)
    return int(rows)


def robust_smooth_loss_v2(logits, target, cur_time, *,
                          total_iterations, exp_base, transit_time_ratio,
                          ignore_index, eps_per_class, block_rows=None):
    """logits: (..., C) float (native dtype kept); target: (...) int; scalar f32 loss."""
    C = logits.shape[-1]
    x = logits.reshape(-1, C)                       # keep native dtype (bf16 halves HBM read)
    t = target.reshape(-1, 1).astype(jnp.int32)     # (N, 1)
    N = x.shape[0]

    vmem_limit = _vmem_limit_bytes()
    if block_rows is None:
        block_rows = _pick_block_rows(N, C, x.dtype.itemsize, vmem_limit)
    num_tiles = pl.cdiv(N, block_rows)

    eps_vec = eps_per_class.reshape(1, C).astype(jnp.float32)

    kernel = _make_loss_kernel(ignore_index, C, N, block_rows)

    parts = pl.pallas_call(
        kernel,
        out_shape=jax.ShapeDtypeStruct((num_tiles, _SUBLANES, _LANES), jnp.float32),
        grid_spec=pltpu.PrefetchScalarGridSpec(
            num_scalar_prefetch=0,
            grid=(num_tiles,),
            in_specs=[
                pl.BlockSpec((block_rows, C), lambda i: (i, 0)),   # logits tile
                pl.BlockSpec((block_rows, 1), lambda i: (i, 0)),   # targets tile
                pl.BlockSpec((1, C), lambda i: (0, 0)),            # per-class eps
            ],
            out_specs=pl.BlockSpec((1, _SUBLANES, _LANES), lambda i: (i, 0, 0)),
        ),
        compiler_params=pltpu.CompilerParams(
            dimension_semantics=("parallel",),       # per-tile partials keep v7x 2-TC sharding
            vmem_limit_bytes=vmem_limit,             # generation-aware (v7x vs v5e/v6e)
        ),
    )(x, t, eps_vec)

    ce_total = jnp.sum(parts[:, 0, 0])
    cali_total = jnp.sum(parts[:, 1, 0])
    num_valid = jnp.maximum(jnp.sum(parts[:, 2, 0]), 1.0)   # NaN-safe if all ignored

    ce_loss = ce_total / num_valid
    cali_loss = cali_total / num_valid

    # update_epsilon_progressive_adaptive
    time_ratio_minus_half = cur_time / total_iterations - transit_time_ratio
    epsilon = 1.0 / (1.0 + jnp.exp(-exp_base * time_ratio_minus_half))

    return (1.0 - epsilon) * ce_loss + epsilon * cali_loss


def _reference(logits, target, cur_time, *, total_iterations, exp_base,
               transit_time_ratio, ignore_index, eps_per_class):
    C = logits.shape[-1]
    x = logits.reshape(-1, C).astype(jnp.float32)
    t = target.reshape(-1).astype(jnp.int32)
    logp = jax.nn.log_softmax(x, axis=-1)
    onehot = jax.nn.one_hot(t, C, dtype=jnp.float32)
    tgt_logp = jnp.sum(onehot * logp, axis=-1)
    mean_logp = jnp.mean(logp, axis=-1)
    eps_t = eps_per_class[t]
    valid = (t != ignore_index).astype(jnp.float32)
    ce = jnp.sum(-tgt_logp * valid) / jnp.sum(valid)
    cali_rows = (1.0 - eps_t) * (-tgt_logp) + eps_t * (-mean_logp)
    cali = jnp.sum(cali_rows * valid) / jnp.sum(valid)
    epsilon = 1.0 / (1.0 + jnp.exp(-exp_base * (cur_time / total_iterations
                                                - transit_time_ratio)))
    return (1.0 - epsilon) * ce + epsilon * cali


if __name__ == "__main__":
    key = jax.random.PRNGKey(0)
    B, T, C = 2, 8, 32                 # input: (B, T, C) logits
    head_cls = 8
    ignore_index = 0
    alpha = 0.3
    exp_base = 5.0
    total_iterations = 1000
    transit_time_ratio = 0.2
    cur_time = 300.0

    k1, k2, k3, k4, k5, k6 = jax.random.split(key, 6)
    logits = jax.random.normal(k1, (B, T, C), dtype=jnp.float32)
    target = jax.random.randint(k2, (B, T), 0, C, dtype=jnp.int32)

    # deterministic long-tailed class counts (head classes are the most frequent)
    cls_num_list = jnp.array(
        [int(1000 * math.exp(-0.15 * c)) + 1 for c in range(C)], dtype=jnp.float32)
    n_max, n_min = jnp.max(cls_num_list), jnp.min(cls_num_list)
    # per-class smoothing factor (head classes get the largest smoothing)
    eps_per_class = alpha * (cls_num_list - n_min) / (n_max - n_min)

    common = dict(total_iterations=total_iterations, exp_base=exp_base,
                  transit_time_ratio=transit_time_ratio,
                  ignore_index=ignore_index, eps_per_class=eps_per_class)

    # Case 1: auto tile size (>=2 tiles -> exercises packed-partial reduction)
    loss = robust_smooth_loss_v2(logits, target, cur_time, **common)
    loss = jax.block_until_ready(loss)
    ref = _reference(logits, target, cur_time, **common)
    assert jnp.allclose(loss, ref, rtol=1e-5, atol=1e-5), (loss, ref)

    # Case 2: ragged N (15 rows, block_rows=8) to exercise the tail mask
    logits2 = jax.random.normal(k3, (3, 5, C), dtype=jnp.float32)
    target2 = jax.random.randint(k4, (3, 5), 0, C, dtype=jnp.int32)
    loss2 = robust_smooth_loss_v2(logits2, target2, cur_time,
                                  block_rows=8, **common)
    loss2 = jax.block_until_ready(loss2)
    ref2 = _reference(logits2, target2, cur_time, **common)
    assert jnp.allclose(loss2, ref2, rtol=1e-5, atol=1e-5), (loss2, ref2)

    # Case 3: bf16 logits streamed in native dtype, cast to f32 in-kernel only
    logits3 = jax.random.normal(k5, (B, T, C), dtype=jnp.float32).astype(jnp.bfloat16)
    target3 = jax.random.randint(k6, (B, T), 0, C, dtype=jnp.int32)
    loss3 = robust_smooth_loss_v2(logits3, target3, cur_time, **common)
    loss3 = jax.block_until_ready(loss3)
    ref3 = _reference(logits3, target3, cur_time, **common)
    assert jnp.allclose(loss3, ref3, rtol=1e-4, atol=1e-4), (loss3, ref3)

    print("KERNEL_OK")
</pallas_src>

<mosaic_0001>
module attributes {stable_mosaic.version = 11 : i64} {
  func.func @kernel(%arg0: i32, %arg1: memref<8x32xf32, #tpu.memory_space<vmem>>, %arg2: memref<8x1xi32, #tpu.memory_space<vmem>>, %arg3: memref<1x32xf32, #tpu.memory_space<vmem>>, %arg4: memref<1x8x128xf32, #tpu.memory_space<vmem>>) attributes {dimension_semantics = [#tpu.dimension_semantics<parallel>], iteration_bounds = array<i64: 2>, scalar_prefetch = 0 : i64, scratch_operands = 0 : i64, tpu.core_type = #tpu.core_type<tc>, window_params = [{transform_indices = @transform_0, window_bounds = array<i64: 8, 32>}, {transform_indices = @transform_1, window_bounds = array<i64: 8, 1>}, {pipeline_mode = #tpu.pipeline_mode<synchronous>, transform_indices = @transform_2, window_bounds = array<i64: 1, 32>}, {transform_indices = @transform_3, window_bounds = array<i64: 1, 8, 128>}]} {
    %c0 = arith.constant 0 : index
    %c0_0 = arith.constant 0 : index
    %0 = vector.load %arg1[%c0, %c0_0] : memref<8x32xf32, #tpu.memory_space<vmem>>, vector<8x32xf32>
    %c0_1 = arith.constant 0 : index
    %c0_2 = arith.constant 0 : index
    %1 = vector.load %arg2[%c0_1, %c0_2] : memref<8x1xi32, #tpu.memory_space<vmem>>, vector<8x1xi32>
    %c0_3 = arith.constant 0 : index
    %c0_4 = arith.constant 0 : index
    %2 = vector.load %arg3[%c0_3, %c0_4] : memref<1x32xf32, #tpu.memory_space<vmem>>, vector<1x32xf32>
    %3 = tpu.iota {dimensions = array<i32: 1>} : vector<8x32xi32>
    %4 = vector.broadcast %1 : vector<8x1xi32> to vector<8x32xi32>
    %5 = arith.cmpi eq, %3, %4 : vector<8x32xi32>
    %cst = arith.constant dense<0xFF800000> : vector<8xf32>
    %6 = vector.multi_reduction <maximumf>, %0, %cst [1] : vector<8x32xf32> to vector<8xf32>
    %7 = vector.shape_cast %6 : vector<8xf32> to vector<8x1xf32>
    %8 = vector.broadcast %7 : vector<8x1xf32> to vector<8x32xf32>
    %9 = arith.subf %0, %8 : vector<8x32xf32>
    %10 = math.exp %9 : vector<8x32xf32>
    %cst_5 = arith.constant dense<0.000000e+00> : vector<8xf32>
    %11 = vector.multi_reduction <add>, %10, %cst_5 [1] : vector<8x32xf32> to vector<8xf32>
    %12 = vector.shape_cast %11 : vector<8xf32> to vector<8x1xf32>
    %13 = math.log %12 : vector<8x1xf32>
    %14 = arith.addf %7, %13 : vector<8x1xf32>
    %cst_6 = arith.constant dense<0.000000e+00> : vector<8xf32>
    %15 = vector.multi_reduction <add>, %0, %cst_6 [1] : vector<8x32xf32> to vector<8xf32>
    %16 = vector.shape_cast %15 : vector<8xf32> to vector<8x1xf32>
    %cst_7 = arith.constant 0.000000e+00 : f32
    %17 = vector.broadcast %cst_7 : f32 to vector<8x32xf32>
    %18 = arith.select %5, %0, %17 : vector<8x32xi1>, vector<8x32xf32>
    %cst_8 = arith.constant dense<0.000000e+00> : vector<8xf32>
    %19 = vector.multi_reduction <add>, %18, %cst_8 [1] : vector<8x32xf32> to vector<8xf32>
    %20 = vector.shape_cast %19 : vector<8xf32> to vector<8x1xf32>
    %cst_9 = arith.constant 0.000000e+00 : f32
    %21 = vector.shape_cast %2 : vector<1x32xf32> to vector<1x32xf32>
    %22 = vector.broadcast %21 : vector<1x32xf32> to vector<8x32xf32>
    %23 = vector.broadcast %cst_9 : f32 to vector<8x32xf32>
    %24 = arith.select %5, %22, %23 : vector<8x32xi1>, vector<8x32xf32>
    %cst_10 = arith.constant dense<0.000000e+00> : vector<8xf32>
    %25 = vector.multi_reduction <add>, %24, %cst_10 [1] : vector<8x32xf32> to vector<8xf32>
    %26 = vector.shape_cast %25 : vector<8xf32> to vector<8x1xf32>
    %27 = arith.subf %20, %14 : vector<8x1xf32>
    %cst_11 = arith.constant 3.125000e-02 : f32
    %28 = vector.broadcast %cst_11 : f32 to vector<8x1xf32>
    %29 = arith.mulf %16, %28 : vector<8x1xf32>
    %30 = arith.subf %29, %14 : vector<8x1xf32>
    %c8_i32 = arith.constant 8 : i32
    %31 = arith.muli %arg0, %c8_i32 : i32
    %32 = tpu.iota {dimensions = array<i32: 0>} : vector<8x1xi32>
    %33 = vector.broadcast %31 : i32 to vector<8x1xi32>
    %34 = arith.addi %33, %32 : vector<8x1xi32>
    %c0_i32 = arith.constant 0 : i32
    %35 = vector.broadcast %c0_i32 : i32 to vector<8x1xi32>
    %36 = arith.cmpi ne, %1, %35 : vector<8x1xi32>
    %c16_i32 = arith.constant 16 : i32
    %37 = vector.broadcast %c16_i32 : i32 to vector<8x1xi32>
    %38 = arith.cmpi slt, %34, %37 : vector<8x1xi32>
    %39 = arith.andi %36, %38 : vector<8x1xi1>
    %cst_12 = arith.constant 0.000000e+00 : f32
    %40 = vector.broadcast %cst_12 : f32 to vector<8x1xf32>
    %41 = arith.subf %40, %27 : vector<8x1xf32>
    %cst_13 = arith.constant 1.000000e+00 : f32
    %42 = vector.broadcast %cst_13 : f32 to vector<8x1xf32>
    %43 = arith.subf %42, %26 : vector<8x1xf32>
    %cst_14 = arith.constant 0.000000e+00 : f32
    %44 = vector.broadcast %cst_14 : f32 to vector<8x1xf32>
    %45 = arith.subf %44, %27 : vector<8x1xf32>
    %46 = arith.mulf %43, %45 : vector<8x1xf32>
    %cst_15 = arith.constant 0.000000e+00 : f32
    %47 = vector.broadcast %cst_15 : f32 to vector<8x1xf32>
    %48 = arith.subf %47, %30 : vector<8x1xf32>
    %49 = arith.mulf %26, %48 : vector<8x1xf32>
    %50 = arith.addf %46, %49 : vector<8x1xf32>
    %cst_16 = arith.constant 0.000000e+00 : f32
    %51 = vector.broadcast %cst_16 : f32 to vector<8x1xf32>
    %52 = arith.select %39, %41, %51 : vector<8x1xi1>, vector<8x1xf32>
    %cst_17 = arith.constant 0.000000e+00 : f32
    %53 = vector.broadcast %cst_17 : f32 to vector<8x1xf32>
    %54 = arith.select %39, %50, %53 : vector<8x1xi1>, vector<8x1xf32>
    %55 = vector.shape_cast %52 : vector<8x1xf32> to vector<1x8x1xf32>
    %cst_18 = arith.constant dense<0.000000e+00> : vector<1xf32>
    %56 = vector.multi_reduction <add>, %55, %cst_18 [1, 2] : vector<1x8x1xf32> to vector<1xf32>
    %57 = vector.shape_cast %56 : vector<1xf32> to vector<1x1x1xf32>
    %58 = vector.extract %57[0, 0, 0] : f32 from vector<1x1x1xf32>
    %59 = vector.shape_cast %54 : vector<8x1xf32> to vector<1x8x1xf32>
    %cst_19 = arith.constant dense<0.000000e+00> : vector<1xf32>
    %60 = vector.multi_reduction <add>, %59, %cst_19 [1, 2] : vector<1x8x1xf32> to vector<1xf32>
    %61 = vector.shape_cast %60 : vector<1xf32> to vector<1x1x1xf32>
    %62 = vector.extract %61[0, 0, 0] : f32 from vector<1x1x1xf32>
    %63 = arith.extui %39 : vector<8x1xi1> to vector<8x1xi32>
    %64 = arith.sitofp %63 : vector<8x1xi32> to vector<8x1xf32>
    %65 = vector.shape_cast %64 : vector<8x1xf32> to vector<1x8x1xf32>
    %cst_20 = arith.constant dense<0.000000e+00> : vector<1xf32>
    %66 = vector.multi_reduction <add>, %65, %cst_20 [1, 2] : vector<1x8x1xf32> to vector<1xf32>
    %67 = vector.shape_cast %66 : vector<1xf32> to vector<1x1x1xf32>
    %68 = vector.extract %67[0, 0, 0] : f32 from vector<1x1x1xf32>
    %69 = tpu.iota {dimensions = array<i32: 1>} : vector<1x8x128xi32>
    %c0_i32_21 = arith.constant 0 : i32
    %70 = vector.broadcast %c0_i32_21 : i32 to vector<1x8x128xi32>
    %71 = arith.cmpi eq, %69, %70 : vector<1x8x128xi32>
    %c1_i32 = arith.constant 1 : i32
    %72 = vector.broadcast %c1_i32 : i32 to vector<1x8x128xi32>
    %73 = arith.cmpi eq, %69, %72 : vector<1x8x128xi32>
    %c2_i32 = arith.constant 2 : i32
    %74 = vector.broadcast %c2_i32 : i32 to vector<1x8x128xi32>
    %75 = arith.cmpi eq, %69, %74 : vector<1x8x128xi32>
    %cst_22 = arith.constant 0.000000e+00 : f32
    %76 = vector.broadcast %68 : f32 to vector<1x8x128xf32>
    %77 = vector.broadcast %cst_22 : f32 to vector<1x8x128xf32>
    %78 = arith.select %75, %76, %77 : vector<1x8x128xi1>, vector<1x8x128xf32>
    %79 = vector.broadcast %62 : f32 to vector<1x8x128xf32>
    %80 = arith.select %73, %79, %78 : vector<1x8x128xi1>, vector<1x8x128xf32>
    %81 = vector.broadcast %58 : f32 to vector<1x8x128xf32>
    %82 = arith.select %71, %81, %80 : vector<1x8x128xi1>, vector<1x8x128xf32>
    %c0_23 = arith.constant 0 : index
    %c0_24 = arith.constant 0 : index
    %c0_25 = arith.constant 0 : index
    %83 = vector.load %arg4[%c0_23, %c0_24, %c0_25] : memref<1x8x128xf32, #tpu.memory_space<vmem>>, vector<1x8x128xf32>
    tpu.vector_store %arg4[%c0_23, %c0_24, %c0_25], %82 {strides = array<i32>} : memref<1x8x128xf32, #tpu.memory_space<vmem>>, vector<1x8x128xf32>,
    return
  }
  func.func @transform_0(%arg0: i32) -> (i32, i32) {
    %c0_i32 = arith.constant 0 : i32
    %c0_i32_0 = arith.constant 0 : i32
    return %arg0, %c0_i32 : i32, i32
  }
  func.func @transform_1(%arg0: i32) -> (i32, i32) {
    %c0_i32 = arith.constant 0 : i32
    %c0_i32_0 = arith.constant 0 : i32
    return %arg0, %c0_i32 : i32, i32
  }
  func.func @transform_2(%arg0: i32) -> (i32, i32) {
    %c0_i32 = arith.constant 0 : i32
    %c0_i32_0 = arith.constant 0 : i32
    %c0_i32_1 = arith.constant 0 : i32
    return %c0_i32, %c0_i32_0 : i32, i32
  }
  func.func @transform_3(%arg0: i32) -> (i32, i32, i32) {
    %c0_i32 = arith.constant 0 : i32
    %c0_i32_0 = arith.constant 0 : i32
    %c0_i32_1 = arith.constant 0 : i32
    return %arg0, %c0_i32, %c0_i32_0 : i32, i32, i32
  }
}

</mosaic_0001>

<llo_original>
// kernel: tpu_custom_call.1
$region0: #{tpu_custom_call.1}
  #allocation0 [shape = 'u32[]', space=smem, size = 0x4, offset = 0x4, fixed_abs, tag = 'smem constant byte address 0x4 - core index']
  #allocation1 [shape = 'u32[72,128]{1,0:T(1,128)}', space=vmem, size = 0x9000, scoped, tag = 'internal scratch']
  %s0 = inlined_call_operand.vmem [shape: f32[16,32], index: 0, kind: input, shape index: {}]
  %s1 = inlined_call_operand.vmem [shape: s32[16,1], index: 1, kind: input, shape index: {}]
  %s2 = inlined_call_operand.vmem [shape: f32[1,32], index: 2, kind: input, shape index: {}]
  %s3 = inlined_call_operand.hbm [shape: f32[2,8,128], index: 3, kind: output, shape index: {}]
  %s4 = sld [smem:[#allocation0]]
  $region45: #{tpu_custom_call.1} parent=0
    _
  %s6 = ssub.s32 1, %s4
  %s7 = scalar_select 0, %s6, %s4
  $region1: #{tpu_custom_call.1} parent=0
    #allocation2 [shape = 'u8[8192]{0}', space=vmem, size = 0x2000, scoped, tag = 'output window, operand 0']
    #allocation3 [shape = 's32[2]{0}', space=sflag, size = 0x8, scoped, tag = 'scoped memory for tpu_custom_call.1']
    %8 = vsyncpa [#allocation3], 0
    %s9 = scalar_lea.sflag [#allocation3], 1
    %10 = vsyncpa %s9, 0
    loop: start=0, step=1, limit=4
    $region2: #{tpu_custom_call.1} parent=1 // loop_pre_header
      _
    $region3: #{tpu_custom_call.1} parent=1 // loop_header
      %s12 = sphi 0, %s16
      %p13 = scmp.ge.s32.totalorder %s12, 4
      %s22 = sphi 0, %s24
      %s25 = sphi 0, %s22
      %s26 = sphi 0, %s25
      %s42 = sphi 0, %s26
      %s48 = sphi 0, %s50
      %s51 = sphi 0, %s48
      %s52 = sphi 0, %s51
      %s68 = sphi 0, %s52
      %s72 = sphi 0, %s72
      %s74 = sphi 0, %s72
      %s75 = sphi 0, %s74
      %s89 = sphi 0, %s75
      %s95 = sphi 0, %s97
      %s98 = sphi 0, %s95
      %s99 = sphi 0, %s98
      %s115 = sphi 0, %s99
    $region4: #{tpu_custom_call.1} parent=1 // loop_header_branch
      %15 = sbr.rel (%p13) target = $region8
    $region5: #{tpu_custom_call.1} parent=1 // loop_body
      %s17 = ssub.s32 %s12, 1
      %s18 = ssub.s32 %s12, 2
      %s19 = sadd.s32 %s12, 1
      %s20 = ssub.s32 %s12, %s19
      %p21 = scmp.eq.s32.totalorder %s20, 0
      %s23 = sadd.s32 %s22, 1
      %s24 = scalar_select %p21, %s22, %s23
      %p27 = pneg %p21
      %p28 = scmp.eq.s32.totalorder %s12, 1
      %p29 = por %p27, %p28
      %p30 = scmp.ne.s32.totalorder %s22, %s25
      %p31 = scmp.eq.s32.totalorder %s12, 0
      %p32 = por %p30, %p31
      %p33 = scmp.ne.s32.totalorder %s22, %s25
      %p34 = scmp.eq.s32.totalorder %s17, 1
      %p35 = por %p33, %p34
      %p36 = scmp.ne.s32.totalorder %s25, %s26
      %p37 = scmp.eq.s32.totalorder %s17, 0
      %p38 = por %p36, %p37
      %p39 = scmp.ne.s32.totalorder %s25, %s26
      %p40 = scmp.eq.s32.totalorder %s18, 1
      %p41 = por %p39, %p40
      %p43 = scmp.ne.s32.totalorder %s26, %s42
      %p44 = scmp.eq.s32.totalorder %s18, 0
      %p45 = por %p43, %p44
      %s46 = ssub.s32 %s12, %s19
      %p47 = scmp.eq.s32.totalorder %s46, 0
      %s49 = sadd.s32 %s48, 1
      %s50 = scalar_select %p47, %s48, %s49
      %p53 = pneg %p47
      %p54 = scmp.eq.s32.totalorder %s12, 1
      %p55 = por %p53, %p54
      %p56 = scmp.ne.s32.totalorder %s48, %s51
      %p57 = scmp.eq.s32.totalorder %s12, 0
      %p58 = por %p56, %p57
      %p59 = scmp.ne.s32.totalorder %s48, %s51
      %p60 = scmp.eq.s32.totalorder %s17, 1
      %p61 = por %p59, %p60
      %p62 = scmp.ne.s32.totalorder %s51, %s52
      %p63 = scmp.eq.s32.totalorder %s17, 0
      %p64 = por %p62, %p63
      %p65 = scmp.ne.s32.totalorder %s51, %s52
      %p66 = scmp.eq.s32.totalorder %s18, 1
      %p67 = por %p65, %p66
      %p69 = scmp.ne.s32.totalorder %s52, %s68
      %p70 = scmp.eq.s32.totalorder %s18, 0
      %p71 = por %p69, %p70
      %s73 = sadd.s32 %s72, 1
      %p76 = scmp.eq.s32.totalorder %s12, 1
      %p77 = scmp.ne.s32.totalorder %s72, %s74
      %p78 = scmp.eq.s32.totalorder %s12, 0
      %p79 = por %p77, %p78
      %p80 = scmp.ne.s32.totalorder %s72, %s74
      %p81 = scmp.eq.s32.totalorder %s17, 1
      %p82 = por %p80, %p81
      %p83 = scmp.ne.s32.totalorder %s74, %s75
      %p84 = scmp.eq.s32.totalorder %s17, 0
      %p85 = por %p83, %p84
      %p86 = scmp.ne.s32.totalorder %s74, %s75
      %p87 = scmp.eq.s32.totalorder %s18, 1
      %p88 = por %p86, %p87
      %p90 = scmp.ne.s32.totalorder %s75, %s89
      %p91 = scmp.eq.s32.totalorder %s18, 0
      %p92 = por %p90, %p91
      %s93 = ssub.s32 %s12, %s19
      %p94 = scmp.eq.s32.totalorder %s93, 0
      %s96 = sadd.s32 %s95, 1
      %s97 = scalar_select %p94, %s95, %s96
      %p100 = pneg %p94
      %p101 = scmp.eq.s32.totalorder %s12, 1
      %p102 = por %p100, %p101
      %p103 = scmp.ne.s32.totalorder %s95, %s98
      %p104 = scmp.eq.s32.totalorder %s12, 0
      %p105 = por %p103, %p104
      %p106 = scmp.ne.s32.totalorder %s95, %s98
      %p107 = scmp.eq.s32.totalorder %s17, 1
      %p108 = por %p106, %p107
      %p109 = scmp.ne.s32.totalorder %s98, %s99
      %p110 = scmp.eq.s32.totalorder %s17, 0
      %p111 = por %p109, %p110
      %p112 = scmp.ne.s32.totalorder %s98, %s99
      %p113 = scmp.eq.s32.totalorder %s18, 1
      %p114 = por %p112, %p113
      %p116 = scmp.ne.s32.totalorder %s99, %s115
      %p117 = scmp.eq.s32.totalorder %s18, 0
      %p118 = por %p116, %p117
      %p119 = scmp.le.s32.totalorder 1, %s12
      %p120 = scmp.lt.s32.totalorder %s12, 3
      %p121 = pnand %p119, %p120
      %p122 = pneg %p121
      // Predicated region
      $region9: #{tpu_custom_call.1} parent=5 // pred_check
        _
      $region10: #{tpu_custom_call.1} parent=5 // pred_check_branch
        %124 = sbr.rel (%p121) target = $region12
      $region11: #{tpu_custom_call.1} parent=5 // pred_region
        %s125 = ssub.s32 %s12, 1
        // Predicated region
        $region13: #{tpu_custom_call.1} parent=11 // pred_check
          %p126 = pneg %p85
        $region14: #{tpu_custom_call.1} parent=11 // pred_check_branch
          %128 = sbr.rel (%p126) target = $region16
        $region15: #{tpu_custom_call.1} parent=11 // pred_region
          _
        $region16: #{tpu_custom_call.1} parent=11 // pred_fallthru
          _
      $region12: #{tpu_custom_call.1} parent=5 // pred_fallthru
        _
      %p129 = scmp.lt.s32.totalorder %s12, 2
      // Predicated region
      $region17: #{tpu_custom_call.1} parent=5 // pred_check
        %p130 = pneg %p129
      $region18: #{tpu_custom_call.1} parent=5 // pred_check_branch
        %132 = sbr.rel (%p130) target = $region20
      $region19: #{tpu_custom_call.1} parent=5 // pred_region
        // Predicated region
        $region21: #{tpu_custom_call.1} parent=19 // pred_check
          %p133 = pneg %p32
        $region22: #{tpu_custom_call.1} parent=19 // pred_check_branch
          %135 = sbr.rel (%p133) target = $region24
        $region23: #{tpu_custom_call.1} parent=19 // pred_region
          %p136 = scmp.lt.s32.totalorder %s12, 1
          %s137 = scalar_select %p136, %s12, 1
          %s138 = smul.addr %s137, 8
          %s139 = scalar_lea.vmem %s0, %s138
        $region24: #{tpu_custom_call.1} parent=19 // pred_fallthru
          _
        // Predicated region
        $region25: #{tpu_custom_call.1} parent=19 // pred_check
          %p140 = pneg %p58
        $region26: #{tpu_custom_call.1} parent=19 // pred_check_branch
          %142 = sbr.rel (%p140) target = $region28
        $region27: #{tpu_custom_call.1} parent=19 // pred_region
          %p143 = scmp.lt.s32.totalorder %s12, 1
          %s144 = scalar_select %p143, %s12, 1
          %s145 = smul.addr %s144, 8
          %s146 = scalar_lea.vmem %s1, %s145
        $region28: #{tpu_custom_call.1} parent=19 // pred_fallthru
          _
      $region20: #{tpu_custom_call.1} parent=5 // pred_fallthru
        _
      %p147 = scmp.le.s32.totalorder 1, %s12
      %p148 = scmp.lt.s32.totalorder %s12, 3
      %p149 = pnand %p147, %p148
      %p150 = pneg %p149
      // Predicated region
      $region29: #{tpu_custom_call.1} parent=5 // pred_check
        _
      $region30: #{tpu_custom_call.1} parent=5 // pred_check_branch
        %152 = sbr.rel (%p149) target = $region32
      $region31: #{tpu_custom_call.1} parent=5 // pred_region
        %s153 = ssub.s32 %s12, 1
        %p154 = scmp.lt.s32.totalorder %s17, 1
        %s155 = scalar_select %p154, %s17, 1
        %s156 = smul.addr %s155, 8
        %s157 = scalar_lea.vmem %s0, %s156
        %p158 = pneg %p38
        %p159 = pneg %p35
        %p160 = scmp.lt.s32.totalorder %s17, 1
        %s161 = scalar_select %p160, %s17, 1
        %s162 = smul.addr %s161, 8
        %s163 = scalar_lea.vmem %s1, %s162
        %p164 = pneg %p64
        %p165 = pneg %p61
        %p166 = pneg %p85
        %p167 = pneg %p82
        %p168 = pneg %p111
        %p169 = pneg %p108
        %s170 = sand.u32 %s98, 1
        %s171 = scalar_lea.sflag [#allocation3], %s170
        %s172 = sand.u32 %s98, 1
        %s173 = smul.addr %s172, 8
        %s174 = scalar_lea.vmem [#allocation2], %s173
        %p175 = scmp.lt.s32.totalorder %s17, 1
        %s176 = scalar_select %p175, %s17, 1
        %s177 = smul.addr %s176, 8
        %s178 = scalar_lea.vmem %s0, %s177
        %p179 = scmp.lt.s32.totalorder %s17, 1
        %s180 = scalar_select %p179, %s17, 1
        %s181 = smul.addr %s180, 8
        %s182 = scalar_lea.vmem %s1, %s181
        %v183 = vld [vmem:[%s178] sm:$0xff]
        %v184 = vld [vmem:[%s182] sm:$0xff]
        %v185 = vld [vmem:[%s2] sm:$0x1]
        %v186 = vlaneseq
        %v187 = vand.u32 %v186, 127
        %188 = vset.pattern.permute.xlu0 0
        %189 = vperm.xlu0 %188, %v184
        %v190 = vpop.permute.xlu0 %189
        %vm191 = vcmp.eq.s32.totalorder %v187, %v190
        %vm192 = vcmask 261120
        %v193 = vsel %vm192, %v183, -inf
        %194 = vmax.xlane.f32.xlu0 %v193
        %v195 = vpop.xlane.xlu0 %194
        %v196 = vsub.f32 %v183, %v195
        %v197 = vmul.f32 %v196, 1.442695
        %v198 = vpow.pop %v197
        %v199 = vsel %vm192, %v198, 0.0
        %200 = vadd.xlane.f32.xlu0 %v199
        %v201 = vpop.xlane.xlu0 %200
        %v202 = vlog2.pop %v201
        %v203 = vmul.f32 %v202, 0.6931472
        %v204 = vadd.f32 %v195, %v203
        %v205 = vsel %vm192, %v183, 0.0
        %206 = vadd.xlane.f32.xlu0 %v205
        %v207 = vpop.xlane.xlu0 %206
        %v208 = vsel %vm191, %v183, 0.0
        %v209 = vsel %vm192, %v208, 0.0
        %210 = vadd.xlane.f32.xlu0 %v209
        %v211 = vpop.xlane.xlu0 %210
        %v213 = vperm.slane %v185, 0
        %v215 = vsel %vm191, %v213, 0.0
        %v216 = vsel %vm192, %v215, 0.0
        %217 = vadd.xlane.f32.xlu0 %v216
        %v218 = vpop.xlane.xlu0 %217
        %v219 = vsub.f32 %v211, %v204
        %v220 = vmul.f32 %v207, 0.03125
        %v221 = vsub.f32 %v220, %v204
        %s222 = smul.u32 %s17, 8
        %v223 = vlaneseq
        %v224 = vshrl.u32 %v223, 7
        %v225 = vstv %s222
        %v226 = vadd.s32 %v225, %v224
        %vm227 = vcmp.ne.s32.totalorder %v184, 0
        %vm228 = vcmp.lt.s32.totalorder %v226, 16
        %vm229 = vmand %vm227, %vm228
        %v230 = vsub.f32 0.0, %v219
        %v231 = vsub.f32 1.0, %v218
        %v232 = vmul.f32 %v231, %v230
        %v233 = vsub.f32 0.0, %v221
        %v234 = vmul.f32 %v218, %v233
        %v235 = vadd.f32 %v232, %v234
        %v236 = vsel %vm229, %v230, 0.0
        %v237 = vsel %vm229, %v235, 0.0
        %vm238 = vcmask 7168
        %v239 = vsel %vm238, %v236, 0.0
        %240 = vadd.xlane.f32.xlu0 %v239
        %v241 = vpop.xlane.xlu0 %240
        %v242 = vrot.slane %v241, 4
        %v243 = vadd.f32 %v241, %v242
        %v244 = vrot.slane %v243, 2
        %v245 = vadd.f32 %v243, %v244
        %v246 = vrot.slane %v245, 1
        %v247 = vadd.f32 %v245, %v246
        %s248 = vtos %v247
        %v249 = vsel %vm238, %v237, 0.0
        %250 = vadd.xlane.f32.xlu0 %v249
        %v251 = vpop.xlane.xlu0 %250
        %v252 = vrot.slane %v251, 4
        %v253 = vadd.f32 %v251, %v252
        %v254 = vrot.slane %v253, 2
        %v255 = vadd.f32 %v253, %v254
        %v256 = vrot.slane %v255, 1
        %v257 = vadd.f32 %v255, %v256
        %s258 = vtos %v257
        %v259 = vsel %vm229, 1, 0
        %v260 = vcvt.s32.f32 %v259
        %v261 = vsel %vm238, %v260, 0.0
        %262 = vadd.xlane.f32.xlu0 %v261
        %v263 = vpop.xlane.xlu0 %262
        %v264 = vrot.slane %v263, 4
        %v265 = vadd.f32 %v263, %v264
        %v266 = vrot.slane %v265, 2
        %v267 = vadd.f32 %v265, %v266
        %v268 = vrot.slane %v267, 1
        %v269 = vadd.f32 %v267, %v268
        %s270 = vtos %v269
        %vm271 = vcmp.eq.s32.totalorder %v224, 0
        %vm272 = vcmp.eq.s32.totalorder %v224, 1
        %vm273 = vcmp.eq.s32.totalorder %v224, 2
        %v274 = vstv %s270
        %v275 = vsel %vm273, %v274, 0.0
        %v276 = vstv %s258
        %v277 = vsel %vm272, %v276, %v275
        %v278 = vstv %s248
        %v279 = vsel %vm271, %v278, %v277
        %280 = vst [vmem:[%s174] sm:$0xff] %v279
        %s281 = sand.u32 %s98, 1
        %s282 = scalar_lea.sflag [#allocation3], %s281
        %s283 = sand.u32 %s98, 1
        %s284 = smul.addr %s283, 8
        %s285 = scalar_lea.vmem [#allocation2], %s284
        // Predicated region
        $region33: #{tpu_custom_call.1} parent=31 // pred_check
          %p286 = pneg %p108
        $region34: #{tpu_custom_call.1} parent=31 // pred_check_branch
          %288 = sbr.rel (%p286) target = $region36
        $region35: #{tpu_custom_call.1} parent=31 // pred_region
          %290 = vsyncadd %s282, 0
          %s291 = smul.addr %s17, 8
          %s292 = scalar_lea.hbm %s3, %s291
          %s294 = sshll.u32 %s285, 4
          %s295 = int_to_ptr.vmem [resolvable:$true] %s294
          %s296 = sshll.u32 %s292, 4
          %s297 = int_to_ptr.hbm [resolvable:$true] %s296
          %299 = dma.vmem_to_hbm [thread:$0]  %s295, 128, %s297, %s282
        $region36: #{tpu_custom_call.1} parent=31 // pred_fallthru
          _
      $region32: #{tpu_custom_call.1} parent=5 // pred_fallthru
        _
      %p300 = scmp.le.s32.totalorder 2, %s12
      // Predicated region
      $region37: #{tpu_custom_call.1} parent=5 // pred_check
        %p301 = pneg %p300
      $region38: #{tpu_custom_call.1} parent=5 // pred_check_branch
        %303 = sbr.rel (%p301) target = $region40
      $region39: #{tpu_custom_call.1} parent=5 // pred_region
        %s304 = ssub.s32 %s12, 2
        // Predicated region
        $region41: #{tpu_custom_call.1} parent=39 // pred_check
          %p305 = pneg %p114
        $region42: #{tpu_custom_call.1} parent=39 // pred_check_branch
          %307 = sbr.rel (%p305) target = $region44
        $region43: #{tpu_custom_call.1} parent=39 // pred_region
          %s308 = sand.u32 %s99, 1
          %s309 = scalar_lea.sflag [#allocation3], %s308
          %s310 = sand.u32 %s99, 1
          %s311 = smul.addr %s310, 8
          %s312 = scalar_lea.vmem [#allocation2], %s311
          %314 = dma.done %s309, 128
        $region44: #{tpu_custom_call.1} parent=39 // pred_fallthru
          _
      $region40: #{tpu_custom_call.1} parent=5 // pred_fallthru
        _
    $region6: #{tpu_custom_call.1} parent=1 // loop_footer
      %s16 = sadd.s32 1, %s12
    $region7: #{tpu_custom_call.1} parent=1 // loop_footer_branch
      %11 = sbr.rel target = $region3
    $region8: #{tpu_custom_call.1} parent=1 // loop_exit
      _
    %315 = vsyncpa [#allocation3], 1
    %s316 = scalar_lea.sflag [#allocation3], 1
    %317 = vsyncpa %s316, 1

</llo_original>
